<compile_context>
chip_gen: v5e
topology: v5e:2x2
jax: 0.10.0
libtpu: 0.0.40
codegen_flags: <defaults>
</compile_context>

<pallas_src>
import functools

import jax
import jax.numpy as jnp
from jax.experimental import pallas as pl
from jax.experimental.pallas import tpu as pltpu

EPSILON = 1e-07

NUM_CORES = 2                          # v7x has 2 TCs; harmless (serial) elsewhere
TILE_TARGET_BYTES = 4 * 1024 * 1024    # per-buffer row-tile target
FUSED_LIMIT_F32_BYTES = 4 * 1024 * 1024
VMEM_LIMIT_BYTES = 40 * 1024 * 1024    # < v7x 64 MiB physical; > v5e 16 MiB default


# ----------------------------------------------------------------------------
# Layout helpers
# ----------------------------------------------------------------------------
def _choose_fold(n_rows, channels):
    """Fold factor k dividing n_rows so k*C is a multiple of 128 (prefer >=512).
    Returns None if no reasonable fold exists (caller pads C instead)."""
    best = None
    for k in range(1, n_rows + 1):
        lanes = k * channels
        if k > 1 and lanes > 8192:      # don't create absurdly wide rows
            break
        if n_rows % k or lanes % 128:
            continue
        best = k
        if lanes >= 512:
            break
    return best


def _choose_row_tile(rows, lanes, itemsize):
    """Row tile: ~TILE_TARGET_BYTES per buffer, multiple of the sublane packing
    granularity for the dtype, preferring an exact divisor of rows."""
    gran = 8 * max(1, 4 // itemsize)            # 8 f32, 16 bf16, 32 int8/fp8
    cap = (TILE_TARGET_BYTES // (itemsize * lanes)) // gran * gran
    cap = max(gran, cap)
    if rows <= cap:
        return rows                              # single full-extent tile (legal)
    for tm in range(cap, gran - 1, -gran):       # largest dividing tile
        if rows % tm == 0:
            return tm
    return cap                                   # rare: caller zero-pads rows


# ----------------------------------------------------------------------------
# Kernels
# ----------------------------------------------------------------------------
def _fused_kernel(x_ref, g_ref, b_ref, o_ref, *, inv_n, valid_lanes):
    """Whole tensor resident in VMEM: centered variance (matches reference)."""
    x = x_ref[...].astype(jnp.float32)
    lanes = x.shape[1]
    mean = jnp.sum(x) * inv_n                     # padded zeros contribute 0
    centered = x - mean
    sq = centered * centered
    if valid_lanes != lanes:                      # mask zero-padded lanes
        lane_ids = jax.lax.broadcasted_iota(jnp.int32, x.shape, dimension=1)
        sq = jnp.where(lane_ids < valid_lanes, sq, 0.0)
    var = jnp.sum(sq) * inv_n
    inv_std = jax.lax.rsqrt(var + EPSILON)
    scale = g_ref[...] * inv_std                  # (1, lanes)
    shift = b_ref[...] - mean * scale
    o_ref[...] = (x * scale + shift).astype(o_ref.dtype)


def _reduce_kernel(x_ref, sum_ref, sq_ref, *, tiles_per_core, num_tiles):
    """Per-core per-lane partial sum / sum-of-squares, accumulated in the
    resident output block (row 0 of an (8, lanes) slab per core)."""
    c = pl.program_id(0)
    t = pl.program_id(1)

    @pl.when(t == 0)
    def _init():
        sum_ref[...] = jnp.zeros_like(sum_ref)
        sq_ref[...] = jnp.zeros_like(sq_ref)

    @pl.when(c * tiles_per_core + t < num_tiles)   # mask the clamped edge tile
    def _accumulate():
        x = x_ref[...].astype(jnp.float32)
        sum_ref[0:1, :] += jnp.sum(x, axis=0, keepdims=True)
        sq_ref[0:1, :] += jnp.sum(x * x, axis=0, keepdims=True)


def _normalize_kernel(scale_ref, shift_ref, x_ref, o_ref):
    x = x_ref[...].astype(jnp.float32)
    o_ref[...] = (x * scale_ref[...] + shift_ref[...]).astype(o_ref.dtype)


# ----------------------------------------------------------------------------
# Streaming (two-pass) path
# ----------------------------------------------------------------------------
def _two_pass(x2d, g_lane, b_lane, inv_n, out_dtype):
    rows, lanes = x2d.shape
    itemsize = jnp.dtype(x2d.dtype).itemsize
    tm = _choose_row_tile(rows, lanes, itemsize)

    rows_total = rows
    if rows % tm:
        # Rare fallback (no sublane-multiple divisor of rows): zero-pad rows.
        # Zero rows are inert for sum/sumsq (inv_n uses the true N); the padded
        # output rows are sliced off below.
        rows_total = ((rows + tm - 1) // tm) * tm
        x2d = jnp.pad(x2d, ((0, rows_total - rows), (0, 0)))

    num_tiles = rows_total // tm
    tiles_per_core = (num_tiles + NUM_CORES - 1) // NUM_CORES

    def x_map(c, t):
        # Clamp so the (possibly) extra tile of the last core re-reads a valid
        # block; its contribution is skipped inside the kernel via pl.when.
        return (jnp.minimum(c * tiles_per_core + t, num_tiles - 1), 0)

    # Pass 0: per-core partial moments (split across the 2 TCs on v7x).
    part_sum, part_sq = pl.pallas_call(
        functools.partial(_reduce_kernel,
                          tiles_per_core=tiles_per_core, num_tiles=num_tiles),
        out_shape=(jax.ShapeDtypeStruct((NUM_CORES * 8, lanes), jnp.float32),
                   jax.ShapeDtypeStruct((NUM_CORES * 8, lanes), jnp.float32)),
        grid=(NUM_CORES, tiles_per_core),
        in_specs=[pl.BlockSpec((tm, lanes), x_map)],
        out_specs=[pl.BlockSpec((8, lanes), lambda c, t: (c, 0)),
                   pl.BlockSpec((8, lanes), lambda c, t: (c, 0))],
        compiler_params=pltpu.CompilerParams(
            dimension_semantics=("parallel", "arbitrary"),
            vmem_limit_bytes=VMEM_LIMIT_BYTES),
    )(x2d)

    # Tiny cross-core combine + affine fold in plain JAX.
    # TODO(synk): E[x^2]-mean^2 in f32 can lose precision for large-DC inputs;
    # a centered second reduction would match the reference more tightly.
    total_sum = jnp.sum(part_sum)
    total_sq = jnp.sum(part_sq)
    mean = total_sum * inv_n
    var = jnp.maximum(total_sq * inv_n - mean * mean, 0.0)
    inv_std = jax.lax.rsqrt(var + EPSILON)
    scale = g_lane * inv_std                       # (1, lanes)
    shift = b_lane - mean * scale                  # (1, lanes)

    # Pass 1: streaming normalize, out = x * scale + shift.
    out2d = pl.pallas_call(
        _normalize_kernel,
        out_shape=jax.ShapeDtypeStruct((rows_total, lanes), out_dtype),
        grid=(num_tiles,),
        in_specs=[pl.BlockSpec((1, lanes), lambda i: (0, 0)),
                  pl.BlockSpec((1, lanes), lambda i: (0, 0)),
                  pl.BlockSpec((tm, lanes), lambda i: (i, 0))],
        out_specs=pl.BlockSpec((tm, lanes), lambda i: (i, 0)),
        compiler_params=pltpu.CompilerParams(
            dimension_semantics=("parallel",),
            vmem_limit_bytes=VMEM_LIMIT_BYTES),
    )(scale, shift, x2d)

    if rows_total != rows:
        out2d = out2d[:rows]
    return out2d


# ----------------------------------------------------------------------------
# Public entry point
# ----------------------------------------------------------------------------
def instant_layer_norm_ncnn_compat(inputs, gamma, beta):
    """inputs: (B, T, C); gamma, beta: (1, 1, C). Returns (B, T, C)."""
    B, T, C = inputs.shape
    n_rows = B * T
    inv_n = 1.0 / float(n_rows * C)               # true element count (no padding)

    k = _choose_fold(n_rows, C)
    if k is not None:
        lanes = k * C
        rows = n_rows // k
        x2d = inputs.reshape(rows, lanes)
        g_lane = jnp.tile(gamma.reshape(1, C).astype(jnp.float32), (1, k))
        b_lane = jnp.tile(beta.reshape(1, C).astype(jnp.float32), (1, k))
        valid_lanes = lanes
    else:
        # No fold exists: zero-pad C to a multiple of 128 (lane-dense stores).
        c_pad = (-C) % 128
        lanes = C + c_pad
        rows = n_rows
        x2d = jnp.pad(inputs.reshape(n_rows, C), ((0, 0), (0, c_pad)))
        g_lane = jnp.pad(gamma.reshape(1, C).astype(jnp.float32),
                         ((0, 0), (0, c_pad)))
        b_lane = jnp.pad(beta.reshape(1, C).astype(jnp.float32),
                         ((0, 0), (0, c_pad)))
        valid_lanes = C

    out_dtype = inputs.dtype

    if rows * lanes * 4 <= FUSED_LIMIT_F32_BYTES:
        # Fused single-kernel path: whole tensor resident in VMEM.
        out2d = pl.pallas_call(
            functools.partial(_fused_kernel, inv_n=inv_n, valid_lanes=valid_lanes),
            out_shape=jax.ShapeDtypeStruct((rows, lanes), out_dtype),
            grid=(1,),
            in_specs=[pl.BlockSpec((rows, lanes), lambda i: (0, 0)),
                      pl.BlockSpec((1, lanes), lambda i: (0, 0)),
                      pl.BlockSpec((1, lanes), lambda i: (0, 0))],
            out_specs=pl.BlockSpec((rows, lanes), lambda i: (0, 0)),
            compiler_params=pltpu.CompilerParams(
                dimension_semantics=("arbitrary",),
                vmem_limit_bytes=VMEM_LIMIT_BYTES),
        )(x2d, g_lane, b_lane)
    else:
        out2d = _two_pass(x2d, g_lane, b_lane, inv_n, out_dtype)

    if valid_lanes != lanes:
        out2d = out2d[:, :valid_lanes]
    return out2d.reshape(B, T, C)


# ----------------------------------------------------------------------------
# Reference + self-test
# ----------------------------------------------------------------------------
def _reference(inputs, gamma, beta):
    mean = jnp.mean(inputs)
    sub = inputs - mean
    variance = jnp.mean(jnp.square(sub))
    std = jnp.sqrt(variance + EPSILON)
    return sub / std * gamma + beta


if __name__ == "__main__":
    key = jax.random.PRNGKey(0)
    k1, k2 = jax.random.split(key)

    # Small case (fused single-kernel path), matching the module layout (B, T, C).
    B, T, C = 2, 8, 32
    x = jax.random.normal(k1, (B, T, C), dtype=jnp.float32)
    gamma = jnp.ones((1, 1, C), dtype=jnp.float32)   # module init: ones / zeros
    beta = jnp.zeros((1, 1, C), dtype=jnp.float32)
    out = jax.block_until_ready(instant_layer_norm_ncnn_compat(x, gamma, beta))
    ref = _reference(x, gamma, beta)
    assert out.shape == (B, T, C)
    assert jnp.allclose(out, ref, atol=1e-5, rtol=1e-5)

    # Medium case exercising the two-pass streaming path (3 row tiles -> also
    # exercises the masked edge tile of the 2-way core split) with a non-trivial
    # affine.
    B2, T2, C2 = 12, 512, 512
    x2 = jax.random.normal(k2, (B2, T2, C2), dtype=jnp.float32)
    gamma2 = 1.0 + 0.1 * jax.random.normal(jax.random.PRNGKey(1), (1, 1, C2),
                                           dtype=jnp.float32)
    beta2 = 0.1 * jax.random.normal(jax.random.PRNGKey(2), (1, 1, C2),
                                    dtype=jnp.float32)
    out2 = jax.block_until_ready(instant_layer_norm_ncnn_compat(x2, gamma2, beta2))
    ref2 = _reference(x2, gamma2, beta2)
    assert out2.shape == (B2, T2, C2)
    assert jnp.allclose(out2, ref2, atol=1e-4, rtol=1e-4)

    print("KERNEL_OK")
</pallas_src>

<mosaic_0001>
module attributes {stable_mosaic.version = 11 : i64} {
  func.func @_fused_kernel(%arg0: i32, %arg1: memref<1x512xf32, #tpu.memory_space<vmem>>, %arg2: memref<1x512xf32, #tpu.memory_space<vmem>>, %arg3: memref<1x512xf32, #tpu.memory_space<vmem>>, %arg4: memref<1x512xf32, #tpu.memory_space<vmem>>) attributes {dimension_semantics = [#tpu.dimension_semantics<arbitrary>], iteration_bounds = array<i64: 1>, scalar_prefetch = 0 : i64, scratch_operands = 0 : i64, tpu.core_type = #tpu.core_type<tc>, window_params = [{pipeline_mode = #tpu.pipeline_mode<synchronous>, transform_indices = @transform_0, window_bounds = array<i64: 1, 512>}, {pipeline_mode = #tpu.pipeline_mode<synchronous>, transform_indices = @transform_1, window_bounds = array<i64: 1, 512>}, {pipeline_mode = #tpu.pipeline_mode<synchronous>, transform_indices = @transform_2, window_bounds = array<i64: 1, 512>}, {pipeline_mode = #tpu.pipeline_mode<synchronous>, transform_indices = @transform_3, window_bounds = array<i64: 1, 512>}]} {
    %c0 = arith.constant 0 : index
    %c0_0 = arith.constant 0 : index
    %0 = vector.load %arg1[%c0, %c0_0] : memref<1x512xf32, #tpu.memory_space<vmem>>, vector<1x512xf32>
    %1 = vector.shape_cast %0 : vector<1x512xf32> to vector<1x1x512xf32>
    %cst = arith.constant dense<0.000000e+00> : vector<1xf32>
    %2 = vector.multi_reduction <add>, %1, %cst [1, 2] : vector<1x1x512xf32> to vector<1xf32>
    %3 = vector.shape_cast %2 : vector<1xf32> to vector<1x1x1xf32>
    %4 = vector.extract %3[0, 0, 0] : f32 from vector<1x1x1xf32>
    %cst_1 = arith.constant 0.001953125 : f32
    %5 = arith.mulf %4, %cst_1 : f32
    %6 = vector.broadcast %5 : f32 to vector<1x512xf32>
    %7 = arith.subf %0, %6 : vector<1x512xf32>
    %8 = arith.mulf %7, %7 : vector<1x512xf32>
    %9 = vector.shape_cast %8 : vector<1x512xf32> to vector<1x1x512xf32>
    %cst_2 = arith.constant dense<0.000000e+00> : vector<1xf32>
    %10 = vector.multi_reduction <add>, %9, %cst_2 [1, 2] : vector<1x1x512xf32> to vector<1xf32>
    %11 = vector.shape_cast %10 : vector<1xf32> to vector<1x1x1xf32>
    %12 = vector.extract %11[0, 0, 0] : f32 from vector<1x1x1xf32>
    %cst_3 = arith.constant 0.001953125 : f32
    %13 = arith.mulf %12, %cst_3 : f32
    %cst_4 = arith.constant 1.000000e-07 : f32
    %14 = arith.addf %13, %cst_4 : f32
    %15 = math.rsqrt %14 : f32
    %c0_5 = arith.constant 0 : index
    %c0_6 = arith.constant 0 : index
    %16 = vector.load %arg2[%c0_5, %c0_6] : memref<1x512xf32, #tpu.memory_space<vmem>>, vector<1x512xf32>
    %17 = vector.broadcast %15 : f32 to vector<1x512xf32>
    %18 = arith.mulf %16, %17 : vector<1x512xf32>
    %c0_7 = arith.constant 0 : index
    %c0_8 = arith.constant 0 : index
    %19 = vector.load %arg3[%c0_7, %c0_8] : memref<1x512xf32, #tpu.memory_space<vmem>>, vector<1x512xf32>
    %20 = vector.broadcast %5 : f32 to vector<1x512xf32>
    %21 = arith.mulf %20, %18 : vector<1x512xf32>
    %22 = arith.subf %19, %21 : vector<1x512xf32>
    %23 = arith.mulf %0, %18 : vector<1x512xf32>
    %24 = arith.addf %23, %22 : vector<1x512xf32>
    %c0_9 = arith.constant 0 : index
    %c0_10 = arith.constant 0 : index
    %25 = vector.load %arg4[%c0_9, %c0_10] : memref<1x512xf32, #tpu.memory_space<vmem>>, vector<1x512xf32>
    tpu.vector_store %arg4[%c0_9, %c0_10], %24 {strides = array<i32>} : memref<1x512xf32, #tpu.memory_space<vmem>>, vector<1x512xf32>,
    return
  }
  func.func @transform_0(%arg0: i32) -> (i32, i32) {
    %c0_i32 = arith.constant 0 : i32
    %c0_i32_0 = arith.constant 0 : i32
    %c0_i32_1 = arith.constant 0 : i32
    return %c0_i32, %c0_i32_0 : i32, i32
  }
  func.func @transform_1(%arg0: i32) -> (i32, i32) {
    %c0_i32 = arith.constant 0 : i32
    %c0_i32_0 = arith.constant 0 : i32
    %c0_i32_1 = arith.constant 0 : i32
    return %c0_i32, %c0_i32_0 : i32, i32
  }
  func.func @transform_2(%arg0: i32) -> (i32, i32) {
    %c0_i32 = arith.constant 0 : i32
    %c0_i32_0 = arith.constant 0 : i32
    %c0_i32_1 = arith.constant 0 : i32
    return %c0_i32, %c0_i32_0 : i32, i32
  }
  func.func @transform_3(%arg0: i32) -> (i32, i32) {
    %c0_i32 = arith.constant 0 : i32
    %c0_i32_0 = arith.constant 0 : i32
    %c0_i32_1 = arith.constant 0 : i32
    return %c0_i32, %c0_i32_0 : i32, i32
  }
}

</mosaic_0001>

<llo_original>
// kernel: tpu_custom_call.1
$region0: #{tpu_custom_call.1}
  #allocation0 [shape = 'u32[]', space=smem, size = 0x4, offset = 0x4, fixed_abs, tag = 'smem constant byte address 0x4 - core index']
  #allocation1 [shape = 'u32[72,128]{1,0:T(1,128)}', space=vmem, size = 0x9000, scoped, tag = 'internal scratch']
  %s0 = inlined_call_operand.hbm [shape: f32[1,512], index: 0, kind: input, shape index: {}]
  %s1 = inlined_call_operand.hbm [shape: f32[1,512], index: 1, kind: input, shape index: {}]
  %s2 = inlined_call_operand.hbm [shape: f32[1,512], index: 2, kind: input, shape index: {}]
  %s3 = inlined_call_operand.hbm [shape: f32[1,512], index: 3, kind: output, shape index: {}]
  %s4 = sld [smem:[#allocation0]]
  $region34: #{tpu_custom_call.1} parent=0
    _
  %s6 = ssub.s32 1, %s4
  %s7 = scalar_select 0, %s6, %s4
  $region1: #{tpu_custom_call.1} parent=0
    #allocation2 [shape = 'u8[2048]{0}', space=vmem, size = 0x800, scoped, tag = 'input window, operand 0, single buffered']
    #allocation3 [shape = 's32[1]{0}', space=sflag, size = 0x4, scoped, tag = 'scoped memory for tpu_custom_call.1']
    #allocation4 [shape = 's32[1]{0}', space=sflag, size = 0x4, scoped, tag = 'scoped memory for tpu_custom_call.1']
    #allocation5 [shape = 'u8[2048]{0}', space=vmem, size = 0x800, scoped, tag = 'input window, operand 1, single buffered']
    #allocation6 [shape = 's32[1]{0}', space=sflag, size = 0x4, scoped, tag = 'scoped memory for tpu_custom_call.1']
    #allocation7 [shape = 'u8[2048]{0}', space=vmem, size = 0x800, scoped, tag = 'input window, operand 2, single buffered']
    #allocation8 [shape = 'u8[2048]{0}', space=vmem, size = 0x800, scoped, tag = 'output window, operand 0, single buffered']
    %8 = vsyncpa [#allocation3], 0
    %9 = vsyncpa [#allocation6], 0
    %10 = vsyncpa [#allocation4], 0
    // Predicated region
    $region2: #{tpu_custom_call.1} parent=1 // pred_check
      _
    $region3: #{tpu_custom_call.1} parent=1 // pred_check_branch
      %12 = sbr.rel (0) target = $region5
    $region4: #{tpu_custom_call.1} parent=1 // pred_region
      %14 = vsyncadd [#allocation3], 0
      %s16 = sshll.u32 %s0, 4
      %s17 = int_to_ptr.hbm [resolvable:$true] %s16
      %s18 = sshll.u32 [#allocation2], 4
      %s19 = int_to_ptr.vmem [resolvable:$true] %s18
      %21 = dma.hbm_to_vmem [thread:$0]  %s17, 64, %s19, [#allocation3]
    $region5: #{tpu_custom_call.1} parent=1 // pred_fallthru
      _
    // Predicated region
    $region6: #{tpu_custom_call.1} parent=1 // pred_check
      _
    $region7: #{tpu_custom_call.1} parent=1 // pred_check_branch
      %23 = sbr.rel (0) target = $region9
    $region8: #{tpu_custom_call.1} parent=1 // pred_region
      %25 = vsyncadd [#allocation6], 0
      %s27 = sshll.u32 %s1, 4
      %s28 = int_to_ptr.hbm [resolvable:$true] %s27
      %s29 = sshll.u32 [#allocation5], 4
      %s30 = int_to_ptr.vmem [resolvable:$true] %s29
      %32 = dma.hbm_to_vmem [thread:$0]  %s28, 64, %s30, [#allocation6]
    $region9: #{tpu_custom_call.1} parent=1 // pred_fallthru
      _
    // Predicated region
    $region10: #{tpu_custom_call.1} parent=1 // pred_check
      _
    $region11: #{tpu_custom_call.1} parent=1 // pred_check_branch
      %34 = sbr.rel (0) target = $region13
    $region12: #{tpu_custom_call.1} parent=1 // pred_region
      %36 = vsyncadd [#allocation6], 0
      %s38 = sshll.u32 %s2, 4
      %s39 = int_to_ptr.hbm [resolvable:$true] %s38
      %s40 = sshll.u32 [#allocation7], 4
      %s41 = int_to_ptr.vmem [resolvable:$true] %s40
      %43 = dma.hbm_to_vmem [thread:$0]  %s39, 64, %s41, [#allocation6]
    $region13: #{tpu_custom_call.1} parent=1 // pred_fallthru
      _
    // Predicated region
    $region14: #{tpu_custom_call.1} parent=1 // pred_check
      _
    $region15: #{tpu_custom_call.1} parent=1 // pred_check_branch
      %45 = sbr.rel (0) target = $region17
    $region16: #{tpu_custom_call.1} parent=1 // pred_region
      %47 = dma.done [#allocation3], 64
    $region17: #{tpu_custom_call.1} parent=1 // pred_fallthru
      _
    // Predicated region
    $region18: #{tpu_custom_call.1} parent=1 // pred_check
      _
    $region19: #{tpu_custom_call.1} parent=1 // pred_check_branch
      %49 = sbr.rel (0) target = $region21
    $region20: #{tpu_custom_call.1} parent=1 // pred_region
      %51 = dma.done [#allocation6], 64
    $region21: #{tpu_custom_call.1} parent=1 // pred_fallthru
      _
    // Predicated region
    $region22: #{tpu_custom_call.1} parent=1 // pred_check
      _
    $region23: #{tpu_custom_call.1} parent=1 // pred_check_branch
      %53 = sbr.rel (0) target = $region25
    $region24: #{tpu_custom_call.1} parent=1 // pred_region
      %55 = dma.done [#allocation6], 64
    $region25: #{tpu_custom_call.1} parent=1 // pred_fallthru
      _
    %v56 = vld [vmem:[#allocation2] sm:$0xf]
    %v58 = vperm.slane %v56, 0
    %v59 = vperm.slane %v56, 1
    %v60 = vperm.slane %v56, 2
    %v61 = vperm.slane %v56, 3
    %vm66 = vcmask 1040384
    %v67 = vsel %vm66, %v58, 0.0
    %v68 = vsel %vm66, %v59, 0.0
    %v69 = vadd.f32 %v67, %v68
    %v70 = vsel %vm66, %v60, 0.0
    %v71 = vadd.f32 %v69, %v70
    %v72 = vsel %vm66, %v61, 0.0
    %v73 = vadd.f32 %v71, %v72
    %74 = vadd.xlane.f32.xlu0 %v73
    %v75 = vpop.xlane.xlu0 %74
    %v76 = vrot.slane %v75, 4
    %v77 = vadd.f32 %v75, %v76
    %v78 = vrot.slane %v77, 2
    %v79 = vadd.f32 %v77, %v78
    %v80 = vrot.slane %v79, 1
    %v81 = vadd.f32 %v79, %v80
    %s82 = vtos %v81
    %s83 = smul.f32 %s82, 0.001953125
    %v84 = vstv %s83
    %v85 = vsub.f32 %v56, %v84
    %v86 = vmul.f32 %v85, %v85
    %v88 = vperm.slane %v86, 0
    %v89 = vperm.slane %v86, 1
    %v90 = vperm.slane %v86, 2
    %v91 = vperm.slane %v86, 3
    %v96 = vsel %vm66, %v88, 0.0
    %v97 = vsel %vm66, %v89, 0.0
    %v98 = vadd.f32 %v96, %v97
    %v99 = vsel %vm66, %v90, 0.0
    %v100 = vadd.f32 %v98, %v99
    %v101 = vsel %vm66, %v91, 0.0
    %v102 = vadd.f32 %v100, %v101
    %103 = vadd.xlane.f32.xlu0 %v102
    %v104 = vpop.xlane.xlu0 %103
    %v105 = vrot.slane %v104, 4
    %v106 = vadd.f32 %v104, %v105
    %v107 = vrot.slane %v106, 2
    %v108 = vadd.f32 %v106, %v107
    %v109 = vrot.slane %v108, 1
    %v110 = vadd.f32 %v108, %v109
    %s111 = vtos %v110
    %s112 = smul.f32 %s111, 0.001953125
    %s113 = sadd.f32 %s112, 1e-07
    %v114 = vstv %s113
    %v115 = vrsqrt.pop %v114
    %v116 = vmul.f32 %v115, %v114
    %v117 = vmul.f32 %v116, %v115
    %v118 = vmul.f32 0.5, %v117
    %v119 = vsub.f32 1.5, %v118
    %v120 = vmul.f32 %v115, %v119
    %vm121 = vweird.f32 %v114
    %vm122 = vweird.f32 %v115
    %vm123 = vmor %vm121, %vm122
    %v124 = vsel %vm123, %v115, %v120
    %s125 = vtos %v124
    %v126 = vld [vmem:[#allocation5] sm:$0xf]
    %v127 = vstv %s125
    %v128 = vmul.f32 %v126, %v127
    %v129 = vld [vmem:[#allocation7] sm:$0xf]
    %v130 = vmul.f32 %v84, %v128
    %v131 = vsub.f32 %v129, %v130
    %v132 = vmul.f32 %v56, %v128
    %v133 = vadd.f32 %v132, %v131
    %v134 = vlaneseq
    %vm135 = vcmp.ge.s32.totalorder %v134, 0
    %vm136 = vcmp.lt.s32.totalorder %v134, 512
    %vm137 = vmand %vm135, %vm136
    %138 = vst.msk [vmem:[#allocation8] sm:$0xf] %vm137, %v133
    // Predicated region
    $region26: #{tpu_custom_call.1} parent=1 // pred_check
      _
    $region27: #{tpu_custom_call.1} parent=1 // pred_check_branch
      %140 = sbr.rel (0) target = $region29
    $region28: #{tpu_custom_call.1} parent=1 // pred_region
      %142 = vsyncadd [#allocation4], 0
      %s144 = sshll.u32 [#allocation8], 4
      %s145 = int_to_ptr.vmem [resolvable:$true] %s144
      %s146 = sshll.u32 %s3, 4
      %s147 = int_to_ptr.hbm [resolvable:$true] %s146
      %149 = dma.vmem_to_hbm [thread:$0]  %s145, 64, %s147, [#allocation4]
    $region29: #{tpu_custom_call.1} parent=1 // pred_fallthru
      _
    // Predicated region
    $region30: #{tpu_custom_call.1} parent=1 // pred_check
      _
    $region31: #{tpu_custom_call.1} parent=1 // pred_check_branch
      %151 = sbr.rel (0) target = $region33
    $region32: #{tpu_custom_call.1} parent=1 // pred_region
      %153 = dma.done [#allocation4], 64
    $region33: #{tpu_custom_call.1} parent=1 // pred_fallthru
      _
    %154 = vsyncpa [#allocation3], 1
    %155 = vsyncpa [#allocation6], 1
    %156 = vsyncpa [#allocation4], 1

</llo_original>
